<compile_context>
chip_gen: v5e
topology: v5e:2x2
jax: 0.10.0
libtpu: 0.0.40
codegen_flags: <defaults>
</compile_context>

<pallas_src>
import jax
import jax.numpy as jnp
from jax import lax
from jax.experimental import pallas as pl
from jax.experimental.pallas import tpu as pltpu


def _round_up(n, m):
    return ((n + m - 1) // m) * m


def _pad2(a, rows, cols):
    pr, pc = rows - a.shape[0], cols - a.shape[1]
    if pr == 0 and pc == 0:
        return a
    return jnp.pad(a, ((0, pr), (0, pc)))


def attention_kernel(x_ref, w_ref, b_ref, ctx_ref, out_ref):
    # x:   (TK, E)  K-tile of input rows            (streamed)
    # w:   (A, E)   fc weight, PyTorch Linear layout (resident)
    # b:   (1, A)   fc bias                          (resident)
    # ctx: (1, A)   context vector                   (resident)
    # out: (1, E)   accumulator block (same block for every grid step)
    k = pl.program_id(0)

    @pl.when(k == 0)
    def _():
        out_ref[...] = jnp.zeros_like(out_ref)

    x = x_ref[...]
    w = w_ref[...]

    # o = tanh(X @ W.T + b): contract E with E directly — no transposed copy.
    o = lax.dot_general(
        x, w, (((1,), (1,)), ((), ())), preferred_element_type=jnp.float32
    )
    o = jnp.tanh(o + b_ref[...])                              # (TK, A)

    # s = context @ o.T: contract A with A directly — no transposed copy.
    s = lax.dot_general(
        ctx_ref[...], o, (((1,), (1,)), ((), ())),
        preferred_element_type=jnp.float32,
    )                                                         # (1, TK)

    # F.softmax(s, dim=0): softmax over the size-1 axis -> identically 1.
    # Reproduced exactly (exp(0) = 1, denom = 1). Exact reciprocal keeps parity.
    m = jnp.max(s, axis=0, keepdims=True)
    e = jnp.exp(s - m)
    p = e * pl.reciprocal(jnp.sum(e, axis=0, keepdims=True), approx=False)

    # out += p @ X_tile : (1, TK) x (TK, E) -> (1, E), accumulated across tiles.
    out_ref[...] += jnp.dot(p, x, preferred_element_type=jnp.float32).astype(
        out_ref.dtype
    )


def attention(x, w, b, ctx, *, max_rows_per_tile=512):
    """x: (K, E), w: (A, E), b: (1, A), ctx: (1, A)  ->  (1, E) float32."""
    K, E = x.shape
    A = w.shape[0]
    assert w.shape == (A, E) and b.shape == (1, A) and ctx.shape == (1, A)

    # Lane-dense / sublane-aligned padded shapes.
    E_pad = _round_up(E, 128)
    A_pad = _round_up(A, 128)
    TK = min(_round_up(K, 8), max_rows_per_tile)
    K_pad = _round_up(K, TK)

    # Zero padding is inert: padded W rows / b / ctx entries are 0, padded X
    # rows/cols are 0, and the (degenerate) softmax weights are 1 everywhere.
    x_p = _pad2(x, K_pad, E_pad)
    w_p = _pad2(w, A_pad, E_pad)
    b_p = _pad2(b, 1, A_pad)
    ctx_p = _pad2(ctx, 1, A_pad)

    grid = (K_pad // TK,)

    flops = 2 * K_pad * E_pad * A_pad + 2 * K_pad * A_pad + 2 * K_pad * E_pad
    transcendentals = K_pad * A_pad + K_pad  # tanh + exp
    bytes_accessed = 4 * (K_pad * E_pad + A_pad * E_pad + 2 * A_pad + E_pad)

    # Double-buffered X tiles + resident W/b/ctx/out, with headroom; keep the
    # cap small enough for v7x's 64 MiB physical VMEM.
    vmem_needed = 4 * (2 * TK * E_pad + A_pad * E_pad + 4 * A_pad + 2 * E_pad)
    vmem_limit = int(min(max(2 * vmem_needed, 16 << 20), 48 << 20))

    out_p = pl.pallas_call(
        attention_kernel,
        out_shape=jax.ShapeDtypeStruct((1, E_pad), jnp.float32),
        grid=grid,
        in_specs=[
            pl.BlockSpec((TK, E_pad), lambda k: (k, 0)),     # X: streamed tiles
            pl.BlockSpec((A_pad, E_pad), lambda k: (0, 0)),  # W: resident
            pl.BlockSpec((1, A_pad), lambda k: (0, 0)),      # b: resident
            pl.BlockSpec((1, A_pad), lambda k: (0, 0)),      # ctx: resident
        ],
        out_specs=pl.BlockSpec((1, E_pad), lambda k: (0, 0)),  # accumulator
        compiler_params=pltpu.CompilerParams(
            dimension_semantics=("arbitrary",),  # K axis is a reduction
            vmem_limit_bytes=vmem_limit,
        ),
        cost_estimate=pl.CostEstimate(
            flops=flops,
            transcendentals=transcendentals,
            bytes_accessed=bytes_accessed,
        ),
    )(x_p, w_p, b_p, ctx_p)

    return out_p[:, :E] if E_pad != E else out_p


def attention_ref(x, w, b, ctx):
    o = jnp.tanh(x @ w.T + b)          # (K, A)
    s = ctx @ o.T                      # (1, K)
    m = jnp.max(s, axis=0, keepdims=True)
    e = jnp.exp(s - m)
    p = e / jnp.sum(e, axis=0, keepdims=True)
    return p @ x                       # (1, E)


if __name__ == "__main__":
    K, emb_dim, attn_emb_dim = 8, 32, 16

    key = jax.random.PRNGKey(0)
    kx, kw, kb, kc = jax.random.split(key, 4)

    x = jax.random.normal(kx, (K, emb_dim), dtype=jnp.float32)

    # Deterministic parameter init (shapes from nn.Linear(emb_dim, attn_emb_dim)
    # and nn.Parameter(torch.randn(1, attn_emb_dim))).
    bound = 1.0 / jnp.sqrt(emb_dim)
    w = jax.random.uniform(
        kw, (attn_emb_dim, emb_dim), minval=-bound, maxval=bound, dtype=jnp.float32
    )
    b = jax.random.uniform(
        kb, (1, attn_emb_dim), minval=-bound, maxval=bound, dtype=jnp.float32
    )
    ctx = jax.random.normal(kc, (1, attn_emb_dim), dtype=jnp.float32)

    out = attention(x, w, b, ctx)
    out = jax.block_until_ready(out)

    ref = attention_ref(x, w, b, ctx)
    assert out.shape == (1, emb_dim)
    assert jnp.allclose(out, ref, atol=1e-5, rtol=1e-5)

    print("KERNEL_OK")
</pallas_src>

<mosaic_0001>
module attributes {stable_mosaic.version = 11 : i64} {
  func.func @attention_kernel(%arg0: i32, %arg1: memref<8x128xf32, #tpu.memory_space<vmem>>, %arg2: memref<128x128xf32, #tpu.memory_space<vmem>>, %arg3: memref<1x128xf32, #tpu.memory_space<vmem>>, %arg4: memref<1x128xf32, #tpu.memory_space<vmem>>, %arg5: memref<1x128xf32, #tpu.memory_space<vmem>>) attributes {dimension_semantics = [#tpu.dimension_semantics<arbitrary>], iteration_bounds = array<i64: 1>, scalar_prefetch = 0 : i64, scratch_operands = 0 : i64, tpu.core_type = #tpu.core_type<tc>, window_params = [{transform_indices = @transform_0, window_bounds = array<i64: 8, 128>}, {pipeline_mode = #tpu.pipeline_mode<synchronous>, transform_indices = @transform_1, window_bounds = array<i64: 128, 128>}, {pipeline_mode = #tpu.pipeline_mode<synchronous>, transform_indices = @transform_2, window_bounds = array<i64: 1, 128>}, {pipeline_mode = #tpu.pipeline_mode<synchronous>, transform_indices = @transform_3, window_bounds = array<i64: 1, 128>}, {pipeline_mode = #tpu.pipeline_mode<synchronous>, transform_indices = @transform_4, window_bounds = array<i64: 1, 128>}]} {
    %c0_i32 = arith.constant 0 : i32
    %0 = arith.cmpi eq, %arg0, %c0_i32 : i32
    %1 = arith.extui %0 : i1 to i32
    %c0_i32_0 = arith.constant 0 : i32
    %2 = arith.cmpi ne, %1, %c0_i32_0 : i32
    scf.if %2 {
      %cst_16 = arith.constant 0.000000e+00 : f32
      %24 = vector.broadcast %cst_16 : f32 to vector<1x128xf32>
      %c0_17 = arith.constant 0 : index
      %c0_18 = arith.constant 0 : index
      %25 = vector.load %arg5[%c0_17, %c0_18] : memref<1x128xf32, #tpu.memory_space<vmem>>, vector<1x128xf32>
      tpu.vector_store %arg5[%c0_17, %c0_18], %24 {strides = array<i32>} : memref<1x128xf32, #tpu.memory_space<vmem>>, vector<1x128xf32>,
    } else {
    }
    %c0 = arith.constant 0 : index
    %c0_1 = arith.constant 0 : index
    %3 = vector.load %arg1[%c0, %c0_1] : memref<8x128xf32, #tpu.memory_space<vmem>>, vector<8x128xf32>
    %c0_2 = arith.constant 0 : index
    %c0_3 = arith.constant 0 : index
    %4 = vector.load %arg2[%c0_2, %c0_3] : memref<128x128xf32, #tpu.memory_space<vmem>>, vector<128x128xf32>
    %cst = arith.constant dense<0.000000e+00> : vector<8x128xf32>
    %5 = tpu.matmul %3, %4, %cst {dimension_numbers = #tpu.dot_dimension_numbers<[1], [1], [0], [0], [0, 0, 1, 0], [], []>} : vector<8x128xf32>, vector<128x128xf32>, vector<8x128xf32> -> vector<8x128xf32>
    %c0_4 = arith.constant 0 : index
    %c0_5 = arith.constant 0 : index
    %6 = vector.load %arg3[%c0_4, %c0_5] : memref<1x128xf32, #tpu.memory_space<vmem>>, vector<1x128xf32>
    %7 = vector.broadcast %6 : vector<1x128xf32> to vector<8x128xf32>
    %8 = arith.addf %5, %7 : vector<8x128xf32>
    %9 = math.tanh %8 : vector<8x128xf32>
    %c0_6 = arith.constant 0 : index
    %c0_7 = arith.constant 0 : index
    %10 = vector.load %arg4[%c0_6, %c0_7] : memref<1x128xf32, #tpu.memory_space<vmem>>, vector<1x128xf32>
    %cst_8 = arith.constant dense<0.000000e+00> : vector<1x8xf32>
    %11 = tpu.matmul %10, %9, %cst_8 {dimension_numbers = #tpu.dot_dimension_numbers<[1], [1], [0], [0], [0, 0, 1, 0], [], []>} : vector<1x128xf32>, vector<8x128xf32>, vector<1x8xf32> -> vector<1x8xf32>
    %cst_9 = arith.constant dense<0xFF800000> : vector<8xf32>
    %12 = vector.multi_reduction <maximumf>, %11, %cst_9 [0] : vector<1x8xf32> to vector<8xf32>
    %13 = vector.shape_cast %12 : vector<8xf32> to vector<1x8xf32>
    %14 = arith.subf %11, %13 : vector<1x8xf32>
    %15 = math.exp %14 : vector<1x8xf32>
    %cst_10 = arith.constant dense<0.000000e+00> : vector<8xf32>
    %16 = vector.multi_reduction <add>, %15, %cst_10 [0] : vector<1x8xf32> to vector<8xf32>
    %17 = vector.shape_cast %16 : vector<8xf32> to vector<1x8xf32>
    %18 = tpu.reciprocal %17 : vector<1x8xf32> -> vector<1x8xf32>
    %19 = arith.mulf %15, %18 : vector<1x8xf32>
    %c0_11 = arith.constant 0 : index
    %c0_12 = arith.constant 0 : index
    %20 = vector.load %arg5[%c0_11, %c0_12] : memref<1x128xf32, #tpu.memory_space<vmem>>, vector<1x128xf32>
    %cst_13 = arith.constant dense<0.000000e+00> : vector<1x128xf32>
    %21 = tpu.matmul %19, %3, %cst_13 {dimension_numbers = #tpu.dot_dimension_numbers<[1], [0], [0], [1], [0, 0, 1, 1], [], []>} : vector<1x8xf32>, vector<8x128xf32>, vector<1x128xf32> -> vector<1x128xf32>
    %22 = arith.addf %20, %21 : vector<1x128xf32>
    %c0_14 = arith.constant 0 : index
    %c0_15 = arith.constant 0 : index
    %23 = vector.load %arg5[%c0_14, %c0_15] : memref<1x128xf32, #tpu.memory_space<vmem>>, vector<1x128xf32>
    tpu.vector_store %arg5[%c0_14, %c0_15], %22 {strides = array<i32>} : memref<1x128xf32, #tpu.memory_space<vmem>>, vector<1x128xf32>,
    return
  }
  func.func @transform_0(%arg0: i32) -> (i32, i32) {
    %c0_i32 = arith.constant 0 : i32
    %c0_i32_0 = arith.constant 0 : i32
    return %arg0, %c0_i32 : i32, i32
  }
  func.func @transform_1(%arg0: i32) -> (i32, i32) {
    %c0_i32 = arith.constant 0 : i32
    %c0_i32_0 = arith.constant 0 : i32
    %c0_i32_1 = arith.constant 0 : i32
    return %c0_i32, %c0_i32_0 : i32, i32
  }
  func.func @transform_2(%arg0: i32) -> (i32, i32) {
    %c0_i32 = arith.constant 0 : i32
    %c0_i32_0 = arith.constant 0 : i32
    %c0_i32_1 = arith.constant 0 : i32
    return %c0_i32, %c0_i32_0 : i32, i32
  }
  func.func @transform_3(%arg0: i32) -> (i32, i32) {
    %c0_i32 = arith.constant 0 : i32
    %c0_i32_0 = arith.constant 0 : i32
    %c0_i32_1 = arith.constant 0 : i32
    return %c0_i32, %c0_i32_0 : i32, i32
  }
  func.func @transform_4(%arg0: i32) -> (i32, i32) {
    %c0_i32 = arith.constant 0 : i32
    %c0_i32_0 = arith.constant 0 : i32
    %c0_i32_1 = arith.constant 0 : i32
    return %c0_i32, %c0_i32_0 : i32, i32
  }
}

</mosaic_0001>

<llo_original>
// kernel: tpu_custom_call.1
$region0: #{tpu_custom_call.1}
  #allocation0 [shape = 'u32[]', space=smem, size = 0x4, offset = 0x4, fixed_abs, tag = 'smem constant byte address 0x4 - core index']
  #allocation1 [shape = 'u32[72,128]{1,0:T(1,128)}', space=vmem, size = 0x9000, scoped, tag = 'internal scratch']
  %s0 = inlined_call_operand.hbm [shape: f32[8,128], index: 0, kind: input, shape index: {}]
  %s1 = inlined_call_operand.hbm [shape: f32[128,128], index: 1, kind: input, shape index: {}]
  %s2 = inlined_call_operand.vmem [shape: f32[1,128], index: 2, kind: input, shape index: {}]
  %s3 = inlined_call_operand.vmem [shape: f32[1,128], index: 3, kind: input, shape index: {}]
  %s4 = inlined_call_operand.hbm [shape: f32[1,128], index: 4, kind: output, shape index: {}]
  %s5 = sld [smem:[#allocation0]]
  $region38: #{tpu_custom_call.1} parent=0
    _
  %s7 = ssub.s32 1, %s5
  %s8 = scalar_select 0, %s7, %s5
  $region1: #{tpu_custom_call.1} parent=0
    #allocation2 [shape = 'u8[4096]{0}', space=vmem, size = 0x1000, scoped, tag = 'input window, operand 0, single buffered']
    #allocation3 [shape = 's32[1]{0}', space=sflag, size = 0x4, scoped, tag = 'scoped memory for tpu_custom_call.1']
    #allocation4 [shape = 's32[1]{0}', space=sflag, size = 0x4, scoped, tag = 'scoped memory for tpu_custom_call.1']
    #allocation5 [shape = 'u8[65536]{0}', space=vmem, size = 0x10000, scoped, tag = 'input window, operand 1, single buffered']
    #allocation6 [shape = 's32[1]{0}', space=sflag, size = 0x4, scoped, tag = 'scoped memory for tpu_custom_call.1']
    #allocation7 [shape = 'u8[512]{0}', space=vmem, size = 0x400, scoped, tag = 'output window, operand 0, single buffered']
    %9 = vsyncpa [#allocation3], 0
    %10 = vsyncpa [#allocation6], 0
    %11 = vsyncpa [#allocation4], 0
    // Predicated region
    $region2: #{tpu_custom_call.1} parent=1 // pred_check
      _
    $region3: #{tpu_custom_call.1} parent=1 // pred_check_branch
      %13 = sbr.rel (0) target = $region5
    $region4: #{tpu_custom_call.1} parent=1 // pred_region
      %15 = vsyncadd [#allocation3], 0
      %s17 = sshll.u32 %s0, 4
      %s18 = int_to_ptr.hbm [resolvable:$true] %s17
      %s19 = sshll.u32 [#allocation2], 4
      %s20 = int_to_ptr.vmem [resolvable:$true] %s19
      %22 = dma.hbm_to_vmem [thread:$0]  %s18, 128, %s20, [#allocation3]
    $region5: #{tpu_custom_call.1} parent=1 // pred_fallthru
      _
    // Predicated region
    $region6: #{tpu_custom_call.1} parent=1 // pred_check
      _
    $region7: #{tpu_custom_call.1} parent=1 // pred_check_branch
      %24 = sbr.rel (0) target = $region9
    $region8: #{tpu_custom_call.1} parent=1 // pred_region
      %26 = vsyncadd [#allocation6], 0
      %s27 = sshll.u32 %s1, 4
      %s28 = int_to_ptr.hbm [resolvable:$true] %s27
      %s29 = sshll.u32 [#allocation5], 4
      %s30 = int_to_ptr.vmem [resolvable:$true] %s29
      %35 = dma.hbm_to_vmem [thread:$0]  %s28, 2048, %s30, [#allocation6], 128, 128, 8
    $region9: #{tpu_custom_call.1} parent=1 // pred_fallthru
      _
    // Predicated region
    $region10: #{tpu_custom_call.1} parent=1 // pred_check
      _
    $region11: #{tpu_custom_call.1} parent=1 // pred_check_branch
      %37 = sbr.rel (0) target = $region13
    $region12: #{tpu_custom_call.1} parent=1 // pred_region
      _
    $region13: #{tpu_custom_call.1} parent=1 // pred_fallthru
      _
    // Predicated region
    $region14: #{tpu_custom_call.1} parent=1 // pred_check
      _
    $region15: #{tpu_custom_call.1} parent=1 // pred_check_branch
      %39 = sbr.rel (0) target = $region17
    $region16: #{tpu_custom_call.1} parent=1 // pred_region
      _
    $region17: #{tpu_custom_call.1} parent=1 // pred_fallthru
      _
    // Predicated region
    $region18: #{tpu_custom_call.1} parent=1 // pred_check
      _
    $region19: #{tpu_custom_call.1} parent=1 // pred_check_branch
      %41 = sbr.rel (0) target = $region21
    $region20: #{tpu_custom_call.1} parent=1 // pred_region
      %43 = dma.done [#allocation3], 128
    $region21: #{tpu_custom_call.1} parent=1 // pred_fallthru
      _
    // Predicated region
    $region22: #{tpu_custom_call.1} parent=1 // pred_check
      _
    $region23: #{tpu_custom_call.1} parent=1 // pred_check_branch
      %45 = sbr.rel (0) target = $region25
    $region24: #{tpu_custom_call.1} parent=1 // pred_region
      %47 = dma.done [#allocation6], 2048
    $region25: #{tpu_custom_call.1} parent=1 // pred_fallthru
      _
    %p48 = scmp.eq.s32.totalorder 0, 0
    // Predicated region
    $region26: #{tpu_custom_call.1} parent=1 // pred_check
      %p49 = pneg %p48
    $region27: #{tpu_custom_call.1} parent=1 // pred_check_branch
      %51 = sbr.rel (%p49) target = $region29
    $region28: #{tpu_custom_call.1} parent=1 // pred_region
      %52 = vst [vmem:[#allocation7] sm:$0x1] 0.0
    $region29: #{tpu_custom_call.1} parent=1 // pred_fallthru
      _
    %v53 = vld [vmem:[#allocation2] sm:$0xff]
    %v54 = vld [vmem:[#allocation5] sm:$0xff]
    %v55 = vld [vmem:[#allocation5 + $0x8] sm:$0xff]
    %v56 = vld [vmem:[#allocation5 + $0x10] sm:$0xff]
    %v57 = vld [vmem:[#allocation5 + $0x18] sm:$0xff]
    %v58 = vld [vmem:[#allocation5 + $0x20] sm:$0xff]
    %v59 = vld [vmem:[#allocation5 + $0x28] sm:$0xff]
    %v60 = vld [vmem:[#allocation5 + $0x30] sm:$0xff]
    %v61 = vld [vmem:[#allocation5 + $0x38] sm:$0xff]
    %v62 = vld [vmem:[#allocation5 + $0x40] sm:$0xff]
    %v63 = vld [vmem:[#allocation5 + $0x48] sm:$0xff]
    %v64 = vld [vmem:[#allocation5 + $0x50] sm:$0xff]
    %v65 = vld [vmem:[#allocation5 + $0x58] sm:$0xff]
    %v66 = vld [vmem:[#allocation5 + $0x60] sm:$0xff]
    %v67 = vld [vmem:[#allocation5 + $0x68] sm:$0xff]
    %v68 = vld [vmem:[#allocation5 + $0x70] sm:$0xff]
    %v69 = vld [vmem:[#allocation5 + $0x78] sm:$0xff]
    %v70 = vld [vmem:[%s2] sm:$0x1]
    %v72 = vperm.slane %v70, 0
    %74 = vmatpush.xpose.msra.mxu0 %v69
    %75 = vmatpush.xpose.msra.mxu0 %v68
    %76 = vmatpush.xpose.msra.mxu0 %v67
    %77 = vmatpush.xpose.msra.mxu0 %v66
    %78 = vmatpush.xpose.msra.mxu0 %v65
    %79 = vmatpush.xpose.msra.mxu0 %v64
    %80 = vmatpush.xpose.msra.mxu0 %v63
    %81 = vmatpush.xpose.msra.mxu0 %v62
    %82 = vmatpush.xpose.msra.mxu0 %v61
    %83 = vmatpush.xpose.msra.mxu0 %v60
    %84 = vmatpush.xpose.msra.mxu0 %v59
    %85 = vmatpush.xpose.msra.mxu0 %v58
    %86 = vmatpush.xpose.msra.mxu0 %v57
    %87 = vmatpush.xpose.msra.mxu0 %v56
    %88 = vmatpush.xpose.msra.mxu0 %v55
    %89 = vmatpush.xpose.msra.mxu0 %v54
    %90 = vmatmul.f32.gmra.mxu0 %v53
    %v91 = vpop.f32.mrf.mxu0
    %v92 = vadd.f32 %v72, %v91
    %93 = vdwg.mxu0
    %v94 = vtanh.pop %v92
    %v95 = vld [vmem:[%s3] sm:$0x1]
    %96 = vmatpush.xpose.msra.mxu0 0.0
    %97 = vmatpush.xpose.msra.mxu0 0.0
    %98 = vmatpush.xpose.msra.mxu0 0.0
    %99 = vmatpush.xpose.msra.mxu0 0.0
    %100 = vmatpush.xpose.msra.mxu0 0.0
    %101 = vmatpush.xpose.msra.mxu0 0.0
    %102 = vmatpush.xpose.msra.mxu0 0.0
    %103 = vmatpush.xpose.msra.mxu0 0.0
    %104 = vmatpush.xpose.msra.mxu0 0.0
    %105 = vmatpush.xpose.msra.mxu0 0.0
    %106 = vmatpush.xpose.msra.mxu0 0.0
    %107 = vmatpush.xpose.msra.mxu0 0.0
    %108 = vmatpush.xpose.msra.mxu0 0.0
    %109 = vmatpush.xpose.msra.mxu0 0.0
    %110 = vmatpush.xpose.msra.mxu0 0.0
    %111 = vmatpush.xpose.msra.mxu0 %v94
    %112 = vmatmul.f32.gmra.mxu0 %v95
    %v113 = vpop.f32.mrf.mxu0
    %v114 = vadd.f32 0.0, %v113
    %115 = vdwg.mxu0
    %v116 = vsub.f32 %v114, %v114
    %v117 = vmul.f32 %v116, 1.442695
    %v118 = vpow.pop %v117
    %v119 = vadd.f32 %v118, 0.0
    %v120 = vrcp.pop %v119
    %v121 = vmul.f32 %v119, %v120
    %v122 = vsub.f32 1.0, %v121
    %v123 = vmul.f32 %v120, %v122
    %v124 = vadd.f32 %v120, %v123
    %vm125 = vweird.f32 %v119
    %vm126 = vweird.f32 %v120
    %vm127 = vmor %vm125, %vm126
    %v128 = vsel %vm127, %v120, %v124
    %v129 = vand.u32 2147483647, %v119
    %vm130 = vcmp.eq.f32.partialorder %v129, 8.507059e+37
    %v131 = vand.u32 %v119, 2147483648
    %v132 = vor.u32 1.1754944e-38, %v131
    %v133 = vsel %vm130, %v132, %v128
    %v134 = vmul.f32 %v118, %v133
    %v135 = vld [vmem:[#allocation7] sm:$0x1]
    %vm136 = vcmask 64512
    %v138 = vsel %vm136, %v134, 0
    %140 = vmatpush.msra.mxu0 0.0
    %141 = vmatpush.msra.mxu0 0.0
    %142 = vmatpush.msra.mxu0 0.0
    %143 = vmatpush.msra.mxu0 0.0
    %144 = vmatpush.msra.mxu0 0.0
    %145 = vmatpush.msra.mxu0 0.0
    %146 = vmatpush.msra.mxu0 0.0
    %147 = vmatpush.msra.mxu0 0.0
    %148 = vmatpush.msra.mxu0 0.0
    %149 = vmatpush.msra.mxu0 0.0
    %150 = vmatpush.msra.mxu0 0.0
    %151 = vmatpush.msra.mxu0 0.0
    %152 = vmatpush.msra.mxu0 0.0
    %153 = vmatpush.msra.mxu0 0.0
    %154 = vmatpush.msra.mxu0 0.0
    %155 = vmatpush.msra.mxu0 %v53
    %156 = vmatmul.f32.gmra.mxu0 %v138
    %v157 = vpop.f32.mrf.mxu0
    %v158 = vadd.f32 0.0, %v157
    %159 = vdwg.mxu0
    %v160 = vadd.f32 %v135, %v158
    %161 = vst [vmem:[#allocation7] sm:$0x1] %v160
    // Predicated region
    $region30: #{tpu_custom_call.1} parent=1 // pred_check
      _
    $region31: #{tpu_custom_call.1} parent=1 // pred_check_branch
      %163 = sbr.rel (0) target = $region33
    $region32: #{tpu_custom_call.1} parent=1 // pred_region
      %165 = vsyncadd [#allocation4], 0
      %s167 = sshll.u32 [#allocation7], 4
      %s168 = int_to_ptr.vmem [resolvable:$true] %s167
      %s169 = sshll.u32 %s4, 4
      %s170 = int_to_ptr.hbm [resolvable:$true] %s169
      %172 = dma.vmem_to_hbm [thread:$0]  %s168, 16, %s170, [#allocation4]
    $region33: #{tpu_custom_call.1} parent=1 // pred_fallthru
      _
    // Predicated region
    $region34: #{tpu_custom_call.1} parent=1 // pred_check
      _
    $region35: #{tpu_custom_call.1} parent=1 // pred_check_branch
      %174 = sbr.rel (0) target = $region37
    $region36: #{tpu_custom_call.1} parent=1 // pred_region
      %176 = dma.done [#allocation4], 16
    $region37: #{tpu_custom_call.1} parent=1 // pred_fallthru
      _
    %177 = vsyncpa [#allocation3], 1
    %178 = vsyncpa [#allocation6], 1
    %179 = vsyncpa [#allocation4], 1

</llo_original>
